<compile_context>
chip_gen: v7x
topology: tpu7x:2x2x1
jax: 0.10.0
libtpu: 0.0.40
codegen_flags: <defaults>
</compile_context>

<pallas_src>
import functools

import jax
import jax.numpy as jnp
from jax.experimental import pallas as pl
from jax.experimental.pallas import tpu as pltpu


def _softplus(x):
    # numerically stable log(1 + exp(x))
    return jnp.maximum(x, 0.0) + jnp.log1p(jnp.exp(-jnp.abs(x)))


# --------------------------------------------------------------------------
# Fused kernel: factor (MXU) + entropy + fused CE (VPU/EUP), per token tile.
# Class tensors arrive as [C, tile] (tokens on lanes).
# --------------------------------------------------------------------------
def _fused_kernel(hidden_ref, w_ref, logits_ref, bias_ref, labels_ref,
                  scalars_ref, out_ref, *, n_tokens, tile):
    i = pl.program_id(0)

    b = scalars_ref[0]          # bias_lin bias (SMEM scalar)
    penalty = scalars_ref[1]    # entropy penalty (SMEM scalar)

    # ---- mixin factor: softplus(hidden @ w + b) -- the only big-tensor pass
    h = hidden_ref[...]                                           # [T, H]
    w = w_ref[...]                                                # [H, 1]
    f = jnp.dot(h, w, preferred_element_type=jnp.float32) + b     # [T, 1] f32
    factor = jnp.transpose(_softplus(f))                          # [1, T] lane-dense

    # ---- class-axis math, token-on-lane layout ---------------------------
    logits = logits_ref[...].astype(jnp.float32)                  # [C, T]
    bias = bias_ref[...].astype(jnp.float32)                      # [C, T] probs
    labels = labels_ref[...]                                      # [1, T] int32

    # NOTE: log(bias) is -inf for exact-zero probabilities (same hazard as the
    # PyTorch reference); clamp bias upstream if zeros are possible.
    bias_log = jnp.log(bias) * factor                             # [C, T]

    # entropy of softmax(bias_log), reusing the logsumexp exp():
    #   d = bias_log - max, e = exp(d), se = sum(e)
    #   entropy = log(se) - sum(e * d) / se
    bmax = jnp.max(bias_log, axis=0, keepdims=True)
    d = bias_log - bmax
    e = jnp.exp(d)
    se = jnp.sum(e, axis=0, keepdims=True)
    entropy = jnp.log(se) - jnp.sum(e * d, axis=0, keepdims=True) / se   # [1,T]

    # fused cross entropy: the log_softmax(logits) normaliser cancels, so
    #   ce = logsumexp(logits + bias_log) - (logits + bias_log)[label]
    # TODO(synk): F.cross_entropy's default ignore_index=-100 is not masked.
    z = logits + bias_log                                         # [C, T]
    zmax = jnp.max(z, axis=0, keepdims=True)
    zlse = zmax + jnp.log(jnp.sum(jnp.exp(z - zmax), axis=0, keepdims=True))
    cls = jax.lax.broadcasted_iota(jnp.int32, z.shape, 0)
    z_true = jnp.sum(jnp.where(cls == labels, z, 0.0), axis=0, keepdims=True)
    ce = zlse - z_true                                            # [1, T]

    # ---- mask ragged tail (select, NOT multiply: tail may hold garbage) ---
    tok = i * tile + jax.lax.broadcasted_iota(jnp.int32, ce.shape, 1)
    per_token = jnp.where(tok < n_tokens, ce + penalty * entropy, 0.0)
    out_ref[...] = jnp.reshape(
        jnp.sum(per_token, axis=1, keepdims=True), out_ref.shape)


# --------------------------------------------------------------------------
# Wrapper
# --------------------------------------------------------------------------
def learned_mixin_h(num_labels, hidden, logits, bias, teacher_probs, labels,
                    w, b, penalty, *, tile_tokens=1024):
    """Pallas implementation of LearnedMixinH.forward.  teacher_probs unused."""
    del teacher_probs
    B, S, H = hidden.shape
    C = num_labels
    N = B * S
    assert tile_tokens % 128 == 0, "tile_tokens must be a multiple of 128"

    # Full-array blocks for tiny inputs; otherwise a 128-aligned tile with a
    # (possibly partial) last block handled by the in-kernel mask.  No padding
    # copies of the dominant hidden stream.
    tile = min(tile_tokens, N)
    n_tiles = pl.cdiv(N, tile)

    hidden2 = hidden.reshape(N, H)                        # no pad, no cast
    w2 = w.reshape(H, 1).astype(hidden.dtype)             # cast once, host side

    # token-on-lane class streams (~(2C+1)*4 bytes/token); native dtype, cast
    # per-tile inside the kernel.
    logits_cn = logits.reshape(N, C).T
    bias_cn = bias.reshape(N, C).T
    labels_1n = labels.reshape(1, N).astype(jnp.int32)

    scalars = jnp.stack([jnp.asarray(b, jnp.float32).reshape(()),
                         jnp.asarray(penalty, jnp.float32).reshape(())])

    token_idx = lambda i: (0, i)

    partials = pl.pallas_call(
        functools.partial(_fused_kernel, n_tokens=N, tile=tile),
        out_shape=jax.ShapeDtypeStruct((n_tiles, 1, 1), jnp.float32),
        grid_spec=pltpu.PrefetchScalarGridSpec(
            num_scalar_prefetch=0,
            grid=(n_tiles,),
            in_specs=[
                pl.BlockSpec((tile, H), lambda i: (i, 0)),      # hidden
                pl.BlockSpec((H, 1), lambda i: (0, 0)),         # w (resident)
                pl.BlockSpec((C, tile), token_idx),             # logits [C,N]
                pl.BlockSpec((C, tile), token_idx),             # bias   [C,N]
                pl.BlockSpec((1, tile), token_idx),             # labels [1,N]
                pl.BlockSpec(memory_space=pltpu.MemorySpace.SMEM),  # scalars
            ],
            out_specs=pl.BlockSpec((1, 1, 1), lambda i: (i, 0, 0)),
        ),
        compiler_params=pltpu.CompilerParams(
            dimension_semantics=("parallel",)),
    )(hidden2, w2, logits_cn, bias_cn, labels_1n, scalars)

    #   sum_tokens(CE + p*H) / S  ==  B * mean(CE) + p * sum_b(mean_s(entropy))
    return jnp.sum(partials) / S


# --------------------------------------------------------------------------
# Pure-JAX reference (faithful transcription of the PyTorch forward)
# --------------------------------------------------------------------------
def reference_loss(num_labels, hidden, logits, bias, teacher_probs, labels,
                   w, b, penalty):
    del teacher_probs
    logits = logits.astype(jnp.float32)
    logits_log = jax.nn.log_softmax(logits, axis=2)
    factor = jnp.einsum('bsh,ho->bso', hidden, w.reshape(-1, 1)) + b
    factor = jax.nn.softplus(factor.astype(jnp.float32))
    bias_log = jnp.log(bias) * factor
    bias_lp = jax.nn.log_softmax(bias_log, axis=2)
    entropy = -(jnp.exp(bias_lp) * bias_lp).sum(2).mean(1)            # [B]
    z = (logits_log + bias_log).reshape(-1, num_labels)
    lab = labels.reshape(-1)
    ce = jnp.mean(jax.nn.logsumexp(z, axis=-1)
                  - z[jnp.arange(z.shape[0]), lab])                    # scalar
    loss = ce + penalty * entropy                                      # [B]
    return loss.sum()


if __name__ == "__main__":
    B, S, C, H = 2, 8, 4, 768   # hidden dim fixed at 768 by bias_lin
    penalty = 0.03

    key = jax.random.PRNGKey(0)
    k_h, k_l, k_b, k_y, k_w, k_bb = jax.random.split(key, 6)

    hidden = jax.random.normal(k_h, (B, S, H), dtype=jnp.float32) * 0.1
    logits = jax.random.normal(k_l, (B, S, C), dtype=jnp.float32)
    bias_probs = jax.nn.softmax(
        jax.random.normal(k_b, (B, S, C), dtype=jnp.float32), axis=-1)
    labels = jax.random.randint(k_y, (B, S), 0, C, dtype=jnp.int32)
    teacher_probs = jax.nn.softmax(
        jax.random.normal(key, (B, S, C), dtype=jnp.float32), axis=-1)  # unused

    # deterministic bias_lin parameters (torch.nn.Linear(768, 1))
    lim = 1.0 / (H ** 0.5)
    w = jax.random.uniform(k_w, (H,), minval=-lim, maxval=lim,
                           dtype=jnp.float32)
    b = jax.random.uniform(k_bb, (1,), minval=-lim, maxval=lim,
                           dtype=jnp.float32)

    loss = learned_mixin_h(C, hidden, logits, bias_probs, teacher_probs,
                           labels, w, b, penalty)
    loss = jax.block_until_ready(loss)

    ref = reference_loss(C, hidden, logits, bias_probs, teacher_probs,
                         labels, w, b, penalty)
    assert jnp.allclose(loss, ref, rtol=2e-5, atol=2e-5), (loss, ref)

    print("KERNEL_OK")
</pallas_src>

<mosaic_0001>
module attributes {stable_mosaic.version = 11 : i64} {
  func.func @_fused_kernel(%arg0: i32, %arg1: memref<16x768xf32, #tpu.memory_space<vmem>>, %arg2: memref<768x1xf32, #tpu.memory_space<vmem>>, %arg3: memref<4x16xf32, #tpu.memory_space<vmem>>, %arg4: memref<4x16xf32, #tpu.memory_space<vmem>>, %arg5: memref<1x16xi32, #tpu.memory_space<vmem>>, %arg6: memref<2xf32, #tpu.memory_space<smem>>, %arg7: memref<1x1x1xf32, #tpu.memory_space<vmem>>) attributes {dimension_semantics = [#tpu.dimension_semantics<parallel>], iteration_bounds = array<i64: 1>, scalar_prefetch = 0 : i64, scratch_operands = 0 : i64, tpu.core_type = #tpu.core_type<tc>, window_params = [{transform_indices = @transform_0, window_bounds = array<i64: 16, 768>}, {pipeline_mode = #tpu.pipeline_mode<synchronous>, transform_indices = @transform_1, window_bounds = array<i64: 768, 1>}, {transform_indices = @transform_2, window_bounds = array<i64: 4, 16>}, {transform_indices = @transform_3, window_bounds = array<i64: 4, 16>}, {transform_indices = @transform_4, window_bounds = array<i64: 1, 16>}, {transform_indices = @transform_5, window_bounds = array<i64: 2>}, {transform_indices = @transform_6, window_bounds = array<i64: 1, 1, 1>}]} {
    %c0 = arith.constant 0 : index
    %0 = memref.load %arg6[%c0] : memref<2xf32, #tpu.memory_space<smem>>
    %c1 = arith.constant 1 : index
    %1 = memref.load %arg6[%c1] : memref<2xf32, #tpu.memory_space<smem>>
    %c0_0 = arith.constant 0 : index
    %c0_1 = arith.constant 0 : index
    %2 = vector.load %arg1[%c0_0, %c0_1] : memref<16x768xf32, #tpu.memory_space<vmem>>, vector<16x768xf32>
    %c0_2 = arith.constant 0 : index
    %c0_3 = arith.constant 0 : index
    %3 = vector.load %arg2[%c0_2, %c0_3] : memref<768x1xf32, #tpu.memory_space<vmem>>, vector<768x1xf32>
    %cst = arith.constant dense<0.000000e+00> : vector<16x1xf32>
    %4 = tpu.matmul %2, %3, %cst {dimension_numbers = #tpu.dot_dimension_numbers<[1], [0], [0], [1], [0, 0, 1, 1], [], []>} : vector<16x768xf32>, vector<768x1xf32>, vector<16x1xf32> -> vector<16x1xf32>
    %5 = vector.broadcast %0 : f32 to vector<16x1xf32>
    %6 = arith.addf %4, %5 : vector<16x1xf32>
    %cst_4 = arith.constant 0.000000e+00 : f32
    %7 = vector.broadcast %cst_4 : f32 to vector<16x1xf32>
    %8 = arith.maximumf %6, %7 : vector<16x1xf32>
    %9 = math.absf %6 : vector<16x1xf32>
    %cst_5 = arith.constant 0.000000e+00 : f32
    %10 = vector.broadcast %cst_5 : f32 to vector<16x1xf32>
    %11 = arith.subf %10, %9 : vector<16x1xf32>
    %12 = math.exp %11 : vector<16x1xf32>
    %13 = math.log1p %12 : vector<16x1xf32>
    %14 = arith.addf %8, %13 : vector<16x1xf32>
    %15 = tpu.transpose %14, [1, 0] : vector<16x1xf32> -> vector<1x16xf32>
    %c0_6 = arith.constant 0 : index
    %c0_7 = arith.constant 0 : index
    %16 = vector.load %arg3[%c0_6, %c0_7] : memref<4x16xf32, #tpu.memory_space<vmem>>, vector<4x16xf32>
    %c0_8 = arith.constant 0 : index
    %c0_9 = arith.constant 0 : index
    %17 = vector.load %arg4[%c0_8, %c0_9] : memref<4x16xf32, #tpu.memory_space<vmem>>, vector<4x16xf32>
    %c0_10 = arith.constant 0 : index
    %c0_11 = arith.constant 0 : index
    %18 = vector.load %arg5[%c0_10, %c0_11] : memref<1x16xi32, #tpu.memory_space<vmem>>, vector<1x16xi32>
    %19 = math.log %17 : vector<4x16xf32>
    %20 = vector.broadcast %15 : vector<1x16xf32> to vector<4x16xf32>
    %21 = arith.mulf %19, %20 : vector<4x16xf32>
    %cst_12 = arith.constant dense<0xFF800000> : vector<16xf32>
    %22 = vector.multi_reduction <maximumf>, %21, %cst_12 [0] : vector<4x16xf32> to vector<16xf32>
    %23 = vector.shape_cast %22 : vector<16xf32> to vector<1x16xf32>
    %24 = vector.broadcast %23 : vector<1x16xf32> to vector<4x16xf32>
    %25 = arith.subf %21, %24 : vector<4x16xf32>
    %26 = math.exp %25 : vector<4x16xf32>
    %cst_13 = arith.constant dense<0.000000e+00> : vector<16xf32>
    %27 = vector.multi_reduction <add>, %26, %cst_13 [0] : vector<4x16xf32> to vector<16xf32>
    %28 = vector.shape_cast %27 : vector<16xf32> to vector<1x16xf32>
    %29 = math.log %28 : vector<1x16xf32>
    %30 = arith.mulf %26, %25 : vector<4x16xf32>
    %cst_14 = arith.constant dense<0.000000e+00> : vector<16xf32>
    %31 = vector.multi_reduction <add>, %30, %cst_14 [0] : vector<4x16xf32> to vector<16xf32>
    %32 = vector.shape_cast %31 : vector<16xf32> to vector<1x16xf32>
    %33 = arith.divf %32, %28 : vector<1x16xf32>
    %34 = arith.subf %29, %33 : vector<1x16xf32>
    %35 = arith.addf %16, %21 : vector<4x16xf32>
    %cst_15 = arith.constant dense<0xFF800000> : vector<16xf32>
    %36 = vector.multi_reduction <maximumf>, %35, %cst_15 [0] : vector<4x16xf32> to vector<16xf32>
    %37 = vector.shape_cast %36 : vector<16xf32> to vector<1x16xf32>
    %38 = vector.broadcast %37 : vector<1x16xf32> to vector<4x16xf32>
    %39 = arith.subf %35, %38 : vector<4x16xf32>
    %40 = math.exp %39 : vector<4x16xf32>
    %cst_16 = arith.constant dense<0.000000e+00> : vector<16xf32>
    %41 = vector.multi_reduction <add>, %40, %cst_16 [0] : vector<4x16xf32> to vector<16xf32>
    %42 = vector.shape_cast %41 : vector<16xf32> to vector<1x16xf32>
    %43 = math.log %42 : vector<1x16xf32>
    %44 = arith.addf %37, %43 : vector<1x16xf32>
    %45 = tpu.iota {dimensions = array<i32: 0>} : vector<4x16xi32>
    %46 = vector.broadcast %18 : vector<1x16xi32> to vector<4x16xi32>
    %47 = arith.cmpi eq, %45, %46 : vector<4x16xi32>
    %cst_17 = arith.constant 0.000000e+00 : f32
    %48 = vector.broadcast %cst_17 : f32 to vector<4x16xf32>
    %49 = arith.select %47, %35, %48 : vector<4x16xi1>, vector<4x16xf32>
    %cst_18 = arith.constant dense<0.000000e+00> : vector<16xf32>
    %50 = vector.multi_reduction <add>, %49, %cst_18 [0] : vector<4x16xf32> to vector<16xf32>
    %51 = vector.shape_cast %50 : vector<16xf32> to vector<1x16xf32>
    %52 = arith.subf %44, %51 : vector<1x16xf32>
    %c16_i32 = arith.constant 16 : i32
    %53 = arith.muli %arg0, %c16_i32 : i32
    %54 = tpu.iota {dimensions = array<i32: 1>} : vector<1x16xi32>
    %55 = vector.broadcast %53 : i32 to vector<1x16xi32>
    %56 = arith.addi %55, %54 : vector<1x16xi32>
    %c16_i32_19 = arith.constant 16 : i32
    %57 = vector.broadcast %c16_i32_19 : i32 to vector<1x16xi32>
    %58 = arith.cmpi slt, %56, %57 : vector<1x16xi32>
    %59 = vector.broadcast %1 : f32 to vector<1x16xf32>
    %60 = arith.mulf %59, %34 : vector<1x16xf32>
    %61 = arith.addf %52, %60 : vector<1x16xf32>
    %cst_20 = arith.constant 0.000000e+00 : f32
    %62 = vector.broadcast %cst_20 : f32 to vector<1x16xf32>
    %63 = arith.select %58, %61, %62 : vector<1x16xi1>, vector<1x16xf32>
    %cst_21 = arith.constant dense<0.000000e+00> : vector<1xf32>
    %64 = vector.multi_reduction <add>, %63, %cst_21 [1] : vector<1x16xf32> to vector<1xf32>
    %65 = vector.shape_cast %64 : vector<1xf32> to vector<1x1xf32>
    %66 = vector.shape_cast %65 : vector<1x1xf32> to vector<1x1x1xf32>
    %c0_22 = arith.constant 0 : index
    %c0_23 = arith.constant 0 : index
    %c0_24 = arith.constant 0 : index
    %67 = vector.load %arg7[%c0_22, %c0_23, %c0_24] : memref<1x1x1xf32, #tpu.memory_space<vmem>>, vector<1x1x1xf32>
    tpu.vector_store %arg7[%c0_22, %c0_23, %c0_24], %66 {strides = array<i32>} : memref<1x1x1xf32, #tpu.memory_space<vmem>>, vector<1x1x1xf32>,
    return
  }
  func.func @transform_0(%arg0: i32) -> (i32, i32) {
    %c0_i32 = arith.constant 0 : i32
    %c0_i32_0 = arith.constant 0 : i32
    return %arg0, %c0_i32 : i32, i32
  }
  func.func @transform_1(%arg0: i32) -> (i32, i32) {
    %c0_i32 = arith.constant 0 : i32
    %c0_i32_0 = arith.constant 0 : i32
    %c0_i32_1 = arith.constant 0 : i32
    return %c0_i32, %c0_i32_0 : i32, i32
  }
  func.func @transform_2(%arg0: i32) -> (i32, i32) {
    %c0_i32 = arith.constant 0 : i32
    %c0_i32_0 = arith.constant 0 : i32
    return %c0_i32, %arg0 : i32, i32
  }
  func.func @transform_3(%arg0: i32) -> (i32, i32) {
    %c0_i32 = arith.constant 0 : i32
    %c0_i32_0 = arith.constant 0 : i32
    return %c0_i32, %arg0 : i32, i32
  }
  func.func @transform_4(%arg0: i32) -> (i32, i32) {
    %c0_i32 = arith.constant 0 : i32
    %c0_i32_0 = arith.constant 0 : i32
    return %c0_i32, %arg0 : i32, i32
  }
  func.func @transform_5(%arg0: i32) -> i32 {
    %c0_i32 = arith.constant 0 : i32
    %c0_i32_0 = arith.constant 0 : i32
    return %c0_i32 : i32
  }
  func.func @transform_6(%arg0: i32) -> (i32, i32, i32) {
    %c0_i32 = arith.constant 0 : i32
    %c0_i32_0 = arith.constant 0 : i32
    %c0_i32_1 = arith.constant 0 : i32
    return %arg0, %c0_i32, %c0_i32_0 : i32, i32, i32
  }
}

</mosaic_0001>

<llo_original>
// kernel: tpu_custom_call.1
$region0: #{tpu_custom_call.1}
  #allocation0 [shape = 'u32[]', space=smem, size = 0x4, offset = 0x4, fixed_abs, tag = 'smem constant byte address 0x4 - core index']
  #allocation1 [shape = 'u32[144,128]{1,0:T(1,128)}', space=vmem, size = 0x12000, scoped, tag = 'internal scratch']
  %s0 = inlined_call_operand.vmem [shape: f32[16,768], index: 0, kind: input, shape index: {}]
  %s1 = inlined_call_operand.vmem [shape: f32[768,1], index: 1, kind: input, shape index: {}]
  %s2 = inlined_call_operand.vmem [shape: f32[4,16], index: 2, kind: input, shape index: {}]
  %s3 = inlined_call_operand.vmem [shape: f32[4,16], index: 3, kind: input, shape index: {}]
  %s4 = inlined_call_operand.vmem [shape: s32[1,16], index: 4, kind: input, shape index: {}]
  %s5 = inlined_call_operand.vmem [shape: f32[2], index: 5, kind: input, shape index: {}]
  %s6 = inlined_call_operand.hbm [shape: f32[1,1,1], index: 6, kind: output, shape index: {}]
  %s7 = sld [smem:[#allocation0]]
  $region38: #{tpu_custom_call.1} parent=0
    _
  %s9 = ssub.s32 1, %s7
  %s10 = scalar_select 0, %s9, %s7
  $region1: #{tpu_custom_call.1} parent=0
    #allocation2 [shape = 'u8[512]{0}', space=smem, size = 0x200, scoped, tag = 'input window, operand 5, single buffered']
    #allocation3 [shape = 's32[1]{0}', space=sflag, size = 0x4, scoped, tag = 'scoped memory for tpu_custom_call.1']
    #allocation4 [shape = 's32[1]{0}', space=sflag, size = 0x4, scoped, tag = 'scoped memory for tpu_custom_call.1']
    #allocation5 [shape = 'u8[512]{0}', space=vmem, size = 0x400, scoped, tag = 'output window, operand 0, single buffered']
    %11 = vsyncpa [#allocation4], 0
    %12 = vsyncpa [#allocation3], 0
    // Predicated region
    $region2: #{tpu_custom_call.1} parent=1 // pred_check
      _
    $region3: #{tpu_custom_call.1} parent=1 // pred_check_branch
      %14 = sbr.rel (0) target = $region5
    $region4: #{tpu_custom_call.1} parent=1 // pred_region
      _
    $region5: #{tpu_custom_call.1} parent=1 // pred_fallthru
      _
    // Predicated region
    $region6: #{tpu_custom_call.1} parent=1 // pred_check
      _
    $region7: #{tpu_custom_call.1} parent=1 // pred_check_branch
      %16 = sbr.rel (0) target = $region9
    $region8: #{tpu_custom_call.1} parent=1 // pred_region
      _
    $region9: #{tpu_custom_call.1} parent=1 // pred_fallthru
      _
    // Predicated region
    $region10: #{tpu_custom_call.1} parent=1 // pred_check
      _
    $region11: #{tpu_custom_call.1} parent=1 // pred_check_branch
      %18 = sbr.rel (0) target = $region13
    $region12: #{tpu_custom_call.1} parent=1 // pred_region
      _
    $region13: #{tpu_custom_call.1} parent=1 // pred_fallthru
      _
    // Predicated region
    $region14: #{tpu_custom_call.1} parent=1 // pred_check
      _
    $region15: #{tpu_custom_call.1} parent=1 // pred_check_branch
      %20 = sbr.rel (0) target = $region17
    $region16: #{tpu_custom_call.1} parent=1 // pred_region
      _
    $region17: #{tpu_custom_call.1} parent=1 // pred_fallthru
      _
    // Predicated region
    $region18: #{tpu_custom_call.1} parent=1 // pred_check
      _
    $region19: #{tpu_custom_call.1} parent=1 // pred_check_branch
      %22 = sbr.rel (0) target = $region21
    $region20: #{tpu_custom_call.1} parent=1 // pred_region
      _
    $region21: #{tpu_custom_call.1} parent=1 // pred_fallthru
      _
    // Predicated region
    $region22: #{tpu_custom_call.1} parent=1 // pred_check
      _
    $region23: #{tpu_custom_call.1} parent=1 // pred_check_branch
      %24 = sbr.rel (0) target = $region25
    $region24: #{tpu_custom_call.1} parent=1 // pred_region
      %s26 = ssub.s32 16, 16
      %27 = vsyncadd [#allocation4], %s26
      %s29 = sshll.u32 %s5, 4
      %s30 = int_to_ptr.vmem [resolvable:$true] %s29
      %32 = dma.vmem_to_smem %s30, 16, [#allocation2], [#allocation4]
    $region25: #{tpu_custom_call.1} parent=1 // pred_fallthru
      _
    // Predicated region
    $region26: #{tpu_custom_call.1} parent=1 // pred_check
      _
    $region27: #{tpu_custom_call.1} parent=1 // pred_check_branch
      %34 = sbr.rel (0) target = $region29
    $region28: #{tpu_custom_call.1} parent=1 // pred_region
      %35 = dma.done [#allocation4], 16
    $region29: #{tpu_custom_call.1} parent=1 // pred_fallthru
      _
    %36 = sfence
    %s37 = sld [smem:[#allocation2]]
    %s38 = sld [smem:[#allocation2 + $0x1]]
    %v39 = vld [vmem:[%s0] sm:$0xff]
    %v40 = vld [vmem:[%s0 + $0x8] sm:$0xff]
    %v41 = vld [vmem:[%s0 + $0x10] sm:$0xff]
    %v42 = vld [vmem:[%s0 + $0x18] sm:$0xff]
    %v43 = vld [vmem:[%s0 + $0x20] sm:$0xff]
    %v44 = vld [vmem:[%s0 + $0x28] sm:$0xff]
    %v45 = vld [vmem:[%s0 + $0x30] sm:$0xff]
    %v46 = vld [vmem:[%s0 + $0x38] sm:$0xff]
    %v47 = vld [vmem:[%s0 + $0x40] sm:$0xff]
    %v48 = vld [vmem:[%s0 + $0x48] sm:$0xff]
    %v49 = vld [vmem:[%s0 + $0x50] sm:$0xff]
    %v50 = vld [vmem:[%s0 + $0x58] sm:$0xff]
    %v51 = vld [vmem:[%s1] sm:$0xff]
    %v52 = vld [vmem:[%s1 + $0x8] sm:$0xff]
    %v53 = vld [vmem:[%s1 + $0x10] sm:$0xff]
    %v54 = vld [vmem:[%s1 + $0x18] sm:$0xff]
    %v55 = vld [vmem:[%s1 + $0x20] sm:$0xff]
    %v56 = vld [vmem:[%s1 + $0x28] sm:$0xff]
    %v57 = vld [vmem:[%s1 + $0x30] sm:$0xff]
    %v58 = vld [vmem:[%s1 + $0x38] sm:$0xff]
    %v59 = vld [vmem:[%s1 + $0x40] sm:$0xff]
    %v60 = vld [vmem:[%s1 + $0x48] sm:$0xff]
    %v61 = vld [vmem:[%s1 + $0x50] sm:$0xff]
    %v62 = vld [vmem:[%s1 + $0x58] sm:$0xff]
    %v63 = vld [vmem:[%s1 + $0x60] sm:$0xff]
    %v64 = vld [vmem:[%s1 + $0x68] sm:$0xff]
    %v65 = vld [vmem:[%s1 + $0x70] sm:$0xff]
    %v66 = vld [vmem:[%s1 + $0x78] sm:$0xff]
    %v67 = vld [vmem:[%s1 + $0x80] sm:$0xff]
    %v68 = vld [vmem:[%s1 + $0x88] sm:$0xff]
    %v69 = vld [vmem:[%s1 + $0x90] sm:$0xff]
    %v70 = vld [vmem:[%s1 + $0x98] sm:$0xff]
    %v71 = vld [vmem:[%s1 + $0xa0] sm:$0xff]
    %v72 = vld [vmem:[%s1 + $0xa8] sm:$0xff]
    %v73 = vld [vmem:[%s1 + $0xb0] sm:$0xff]
    %v74 = vld [vmem:[%s1 + $0xb8] sm:$0xff]
    %v75 = vld [vmem:[%s1 + $0xc0] sm:$0xff]
    %v76 = vld [vmem:[%s1 + $0xc8] sm:$0xff]
    %v77 = vld [vmem:[%s1 + $0xd0] sm:$0xff]
    %v78 = vld [vmem:[%s1 + $0xd8] sm:$0xff]
    %v79 = vld [vmem:[%s1 + $0xe0] sm:$0xff]
    %v80 = vld [vmem:[%s1 + $0xe8] sm:$0xff]
    %v81 = vld [vmem:[%s1 + $0xf0] sm:$0xff]
    %v82 = vld [vmem:[%s1 + $0xf8] sm:$0xff]
    %v83 = vld [vmem:[%s1 + $0x100] sm:$0xff]
    %v84 = vld [vmem:[%s1 + $0x108] sm:$0xff]
    %v85 = vld [vmem:[%s1 + $0x110] sm:$0xff]
    %v86 = vld [vmem:[%s1 + $0x118] sm:$0xff]
    %v87 = vld [vmem:[%s1 + $0x120] sm:$0xff]
    %v88 = vld [vmem:[%s1 + $0x128] sm:$0xff]
    %v89 = vld [vmem:[%s1 + $0x130] sm:$0xff]
    %v90 = vld [vmem:[%s1 + $0x138] sm:$0xff]
    %v91 = vld [vmem:[%s1 + $0x140] sm:$0xff]
    %v92 = vld [vmem:[%s1 + $0x148] sm:$0xff]
    %v93 = vld [vmem:[%s1 + $0x150] sm:$0xff]
    %v94 = vld [vmem:[%s1 + $0x158] sm:$0xff]
    %v95 = vld [vmem:[%s1 + $0x160] sm:$0xff]
    %v96 = vld [vmem:[%s1 + $0x168] sm:$0xff]
    %v97 = vld [vmem:[%s1 + $0x170] sm:$0xff]
    %v98 = vld [vmem:[%s1 + $0x178] sm:$0xff]
    %v99 = vld [vmem:[%s1 + $0x180] sm:$0xff]
    %v100 = vld [vmem:[%s1 + $0x188] sm:$0xff]
    %v101 = vld [vmem:[%s1 + $0x190] sm:$0xff]
    %v102 = vld [vmem:[%s1 + $0x198] sm:$0xff]
    %v103 = vld [vmem:[%s1 + $0x1a0] sm:$0xff]
    %v104 = vld [vmem:[%s1 + $0x1a8] sm:$0xff]
    %v105 = vld [vmem:[%s1 + $0x1b0] sm:$0xff]
    %v106 = vld [vmem:[%s1 + $0x1b8] sm:$0xff]
    %v107 = vld [vmem:[%s1 + $0x1c0] sm:$0xff]
    %v108 = vld [vmem:[%s1 + $0x1c8] sm:$0xff]
    %v109 = vld [vmem:[%s1 + $0x1d0] sm:$0xff]
    %v110 = vld [vmem:[%s1 + $0x1d8] sm:$0xff]
    %v111 = vld [vmem:[%s1 + $0x1e0] sm:$0xff]
    %v112 = vld [vmem:[%s1 + $0x1e8] sm:$0xff]
    %v113 = vld [vmem:[%s1 + $0x1f0] sm:$0xff]
    %v114 = vld [vmem:[%s1 + $0x1f8] sm:$0xff]
    %v115 = vld [vmem:[%s1 + $0x200] sm:$0xff]
    %v116 = vld [vmem:[%s1 + $0x208] sm:$0xff]
    %v117 = vld [vmem:[%s1 + $0x210] sm:$0xff]
    %v118 = vld [vmem:[%s1 + $0x218] sm:$0xff]
    %v119 = vld [vmem:[%s1 + $0x220] sm:$0xff]
    %v120 = vld [vmem:[%s1 + $0x228] sm:$0xff]
    %v121 = vld [vmem:[%s1 + $0x230] sm:$0xff]
    %v122 = vld [vmem:[%s1 + $0x238] sm:$0xff]
    %v123 = vld [vmem:[%s1 + $0x240] sm:$0xff]
    %v124 = vld [vmem:[%s1 + $0x248] sm:$0xff]
    %v125 = vld [vmem:[%s1 + $0x250] sm:$0xff]
    %v126 = vld [vmem:[%s1 + $0x258] sm:$0xff]
    %v127 = vld [vmem:[%s1 + $0x260] sm:$0xff]
    %v128 = vld [vmem:[%s1 + $0x268] sm:$0xff]
    %v129 = vld [vmem:[%s1 + $0x270] sm:$0xff]
    %v130 = vld [vmem:[%s1 + $0x278] sm:$0xff]
    %v131 = vld [vmem:[%s1 + $0x280] sm:$0xff]
    %v132 = vld [vmem:[%s1 + $0x288] sm:$0xff]
    %v133 = vld [vmem:[%s1 + $0x290] sm:$0xff]
    %v134 = vld [vmem:[%s1 + $0x298] sm:$0xff]
    %v135 = vld [vmem:[%s1 + $0x2a0] sm:$0xff]
    %v136 = vld [vmem:[%s1 + $0x2a8] sm:$0xff]
    %v137 = vld [vmem:[%s1 + $0x2b0] sm:$0xff]
    %v138 = vld [vmem:[%s1 + $0x2b8] sm:$0xff]
    %v139 = vld [vmem:[%s1 + $0x2c0] sm:$0xff]
    %v140 = vld [vmem:[%s1 + $0x2c8] sm:$0xff]
    %v141 = vld [vmem:[%s1 + $0x2d0] sm:$0xff]
    %v142 = vld [vmem:[%s1 + $0x2d8] sm:$0xff]
    %v143 = vld [vmem:[%s1 + $0x2e0] sm:$0xff]
    %v144 = vld [vmem:[%s1 + $0x2e8] sm:$0xff]
    %v145 = vld [vmem:[%s1 + $0x2f0] sm:$0xff]
    %v146 = vld [vmem:[%s1 + $0x2f8] sm:$0xff]
    %v147 = vstv %s37
    %148 = vmatprep.subr.mxu0 0.0
    %149 = vmatpush1.msra.mxu0 %v51
    %150 = vmatprep.subr.mxu0 0.0
    %151 = vmatpush1.msra.mxu0 %v52
    %152 = vmatprep.subr.mxu0 0.0
    %153 = vmatpush1.msra.mxu0 %v53
    %154 = vmatprep.subr.mxu0 0.0
    %155 = vmatpush1.msra.mxu0 %v54
    %156 = vmatprep.subr.mxu0 0.0
    %157 = vmatpush1.msra.mxu0 %v55
    %158 = vmatprep.subr.mxu0 0.0
    %159 = vmatpush1.msra.mxu0 %v56
    %160 = vmatprep.subr.mxu0 0.0
    %161 = vmatpush1.msra.mxu0 %v57
    %162 = vmatprep.subr.mxu0 0.0
    %163 = vmatpush1.msra.mxu0 %v58
    %164 = vmatprep.subr.mxu0 0.0
    %165 = vmatpush1.msra.mxu0 %v59
    %166 = vmatprep.subr.mxu0 0.0
    %167 = vmatpush1.msra.mxu0 %v60
    %168 = vmatprep.subr.mxu0 0.0
    %169 = vmatpush1.msra.mxu0 %v61
    %170 = vmatprep.subr.mxu0 0.0
    %171 = vmatpush1.msra.mxu0 %v62
    %172 = vmatprep.subr.mxu0 0.0
    %173 = vmatpush1.msra.mxu0 %v63
    %174 = vmatprep.subr.mxu0 0.0
    %175 = vmatpush1.msra.mxu0 %v64
    %176 = vmatprep.subr.mxu0 0.0
    %177 = vmatpush1.msra.mxu0 %v65
    %178 = vmatprep.subr.mxu0 0.0
    %179 = vmatpush1.msra.mxu0 %v66
    %180 = vmatprep.subr.mxu0 0.0
    %181 = vmatpush1.msra.mxu0 %v67
    %182 = vmatprep.subr.mxu0 0.0
    %183 = vmatpush1.msra.mxu0 %v68
    %184 = vmatprep.subr.mxu0 0.0
    %185 = vmatpush1.msra.mxu0 %v69
    %186 = vmatprep.subr.mxu0 0.0
    %187 = vmatpush1.msra.mxu0 %v70
    %188 = vmatprep.subr.mxu0 0.0
    %189 = vmatpush1.msra.mxu0 %v71
    %190 = vmatprep.subr.mxu0 0.0
    %191 = vmatpush1.msra.mxu0 %v72
    %192 = vmatprep.subr.mxu0 0.0
    %193 = vmatpush1.msra.mxu0 %v73
    %194 = vmatprep.subr.mxu0 0.0
    %195 = vmatpush1.msra.mxu0 %v74
    %196 = vmatprep.subr.mxu0 0.0
    %197 = vmatpush1.msra.mxu0 %v75
    %198 = vmatprep.subr.mxu0 0.0
    %199 = vmatpush1.msra.mxu0 %v76
    %200 = vmatprep.subr.mxu0 0.0
    %201 = vmatpush1.msra.mxu0 %v77
    %202 = vmatprep.subr.mxu0 0.0
    %203 = vmatpush1.msra.mxu0 %v78
    %204 = vmatprep.subr.mxu0 0.0
    %205 = vmatpush1.msra.mxu0 %v79
    %206 = vmatprep.subr.mxu0 0.0
    %207 = vmatpush1.msra.mxu0 %v80
    %208 = vmatprep.subr.mxu0 0.0
    %209 = vmatpush1.msra.mxu0 %v81
    %210 = vmatprep.subr.mxu0 0.0
    %211 = vmatpush1.msra.mxu0 %v82
    %212 = vmatprep.mubr.f32.mxu0 %v40
    %213 = vmatmul.mubr.f32.gmra.mrb[0].mxu0 %v39
    %v214 = vpop.f32.mrb[0].mxu0
    %v215 = vadd.f32 %v147, %v214
    %v216 = vpop.f32.mrb[0].mxu0
    %217 = vmatprep.mubr.f32.mxu0 %v46
    %218 = vmatmul.mubr.f32.gmra.mrb[0].mxu0 %v45
    %v219 = vpop.f32.mrb[0].mxu0
    %v220 = vadd.f32 %v147, %v219
    %v221 = vpop.f32.mrb[0].mxu0
    %222 = vdwg.mxu0
    %223 = vmatprep.subr.mxu0 0.0
    %224 = vmatpush1.msra.mxu0 %v83
    %225 = vmatprep.subr.mxu0 0.0
    %226 = vmatpush1.msra.mxu0 %v84
    %227 = vmatprep.subr.mxu0 0.0
    %228 = vmatpush1.msra.mxu0 %v85
    %229 = vmatprep.subr.mxu0 0.0
    %230 = vmatpush1.msra.mxu0 %v86
    %231 = vmatprep.subr.mxu0 0.0
    %232 = vmatpush1.msra.mxu0 %v87
    %233 = vmatprep.subr.mxu0 0.0
    %234 = vmatpush1.msra.mxu0 %v88
    %235 = vmatprep.subr.mxu0 0.0
    %236 = vmatpush1.msra.mxu0 %v89
    %237 = vmatprep.subr.mxu0 0.0
    %238 = vmatpush1.msra.mxu0 %v90
    %239 = vmatprep.subr.mxu0 0.0
    %240 = vmatpush1.msra.mxu0 %v91
    %241 = vmatprep.subr.mxu0 0.0
    %242 = vmatpush1.msra.mxu0 %v92
    %243 = vmatprep.subr.mxu0 0.0
    %244 = vmatpush1.msra.mxu0 %v93
    %245 = vmatprep.subr.mxu0 0.0
    %246 = vmatpush1.msra.mxu0 %v94
    %247 = vmatprep.subr.mxu0 0.0
    %248 = vmatpush1.msra.mxu0 %v95
    %249 = vmatprep.subr.mxu0 0.0
    %250 = vmatpush1.msra.mxu0 %v96
    %251 = vmatprep.subr.mxu0 0.0
    %252 = vmatpush1.msra.mxu0 %v97
    %253 = vmatprep.subr.mxu0 0.0
    %254 = vmatpush1.msra.mxu0 %v98
    %255 = vmatprep.subr.mxu0 0.0
    %256 = vmatpush1.msra.mxu0 %v99
    %257 = vmatprep.subr.mxu0 0.0
    %258 = vmatpush1.msra.mxu0 %v100
    %259 = vmatprep.subr.mxu0 0.0
    %260 = vmatpush1.msra.mxu0 %v101
    %261 = vmatprep.subr.mxu0 0.0
    %262 = vmatpush1.msra.mxu0 %v102
    %263 = vmatprep.subr.mxu0 0.0
    %264 = vmatpush1.msra.mxu0 %v103
    %265 = vmatprep.subr.mxu0 0.0
    %266 = vmatpush1.msra.mxu0 %v104
    %267 = vmatprep.subr.mxu0 0.0
    %268 = vmatpush1.msra.mxu0 %v105
    %269 = vmatprep.subr.mxu0 0.0
    %270 = vmatpush1.msra.mxu0 %v106
    %271 = vmatprep.subr.mxu0 0.0
    %272 = vmatpush1.msra.mxu0 %v107
    %273 = vmatprep.subr.mxu0 0.0
    %274 = vmatpush1.msra.mxu0 %v108
    %275 = vmatprep.subr.mxu0 0.0
    %276 = vmatpush1.msra.mxu0 %v109
    %277 = vmatprep.subr.mxu0 0.0
    %278 = vmatpush1.msra.mxu0 %v110
    %279 = vmatprep.subr.mxu0 0.0
    %280 = vmatpush1.msra.mxu0 %v111
    %281 = vmatprep.subr.mxu0 0.0
    %282 = vmatpush1.msra.mxu0 %v112
    %283 = vmatprep.subr.mxu0 0.0
    %284 = vmatpush1.msra.mxu0 %v113
    %285 = vmatprep.subr.mxu0 0.0
    %286 = vmatpush1.msra.mxu0 %v114
    %287 = vmatprep.mubr.f32.mxu0 %v42
    %288 = vmatmul.mubr.f32.gmra.mrb[0].mxu0 %v41
    %v289 = vpop.f32.mrb[0].mxu0
    %v290 = vadd.f32 %v215, %v289
    %v291 = vpop.f32.mrb[0].mxu0
    %292 = vmatprep.mubr.f32.mxu0 %v48
    %293 = vmatmul.mubr.f32.gmra.mrb[0].mxu0 %v47
    %v294 = vpop.f32.mrb[0].mxu0
    %v295 = vadd.f32 %v220, %v294
    %v296 = vpop.f32.mrb[0].mxu0
    %297 = vdwg.mxu0
    %298 = vmatprep.subr.mxu0 0.0
    %299 = vmatpush1.msra.mxu0 %v115
    %300 = vmatprep.subr.mxu0 0.0
    %301 = vmatpush1.msra.mxu0 %v116
    %302 = vmatprep.subr.mxu0 0.0
    %303 = vmatpush1.msra.mxu0 %v117
    %304 = vmatprep.subr.mxu0 0.0
    %305 = vmatpush1.msra.mxu0 %v118
    %306 = vmatprep.subr.mxu0 0.0
    %307 = vmatpush1.msra.mxu0 %v119
    %308 = vmatprep.subr.mxu0 0.0
    %309 = vmatpush1.msra.mxu0 %v120
    %310 = vmatprep.subr.mxu0 0.0
    %311 = vmatpush1.msra.mxu0 %v121
    %312 = vmatprep.subr.mxu0 0.0
    %313 = vmatpush1.msra.mxu0 %v122
    %314 = vmatprep.subr.mxu0 0.0
    %315 = vmatpush1.msra.mxu0 %v123
    %316 = vmatprep.subr.mxu0 0.0
    %317 = vmatpush1.msra.mxu0 %v124
    %318 = vmatprep.subr.mxu0 0.0
    %319 = vmatpush1.msra.mxu0 %v125
    %320 = vmatprep.subr.mxu0 0.0
    %321 = vmatpush1.msra.mxu0 %v126
    %322 = vmatprep.subr.mxu0 0.0
    %323 = vmatpush1.msra.mxu0 %v127
    %324 = vmatprep.subr.mxu0 0.0
    %325 = vmatpush1.msra.mxu0 %v128
    %326 = vmatprep.subr.mxu0 0.0
    %327 = vmatpush1.msra.mxu0 %v129
    %328 = vmatprep.subr.mxu0 0.0
    %329 = vmatpush1.msra.mxu0 %v130
    %330 = vmatprep.subr.mxu0 0.0
    %331 = vmatpush1.msra.mxu0 %v131
    %332 = vmatprep.subr.mxu0 0.0
    %333 = vmatpush1.msra.mxu0 %v132
    %334 = vmatprep.subr.mxu0 0.0
    %335 = vmatpush1.msra.mxu0 %v133
    %336 = vmatprep.subr.mxu0 0.0
    %337 = vmatpush1.msra.mxu0 %v134
    %338 = vmatprep.subr.mxu0 0.0
    %339 = vmatpush1.msra.mxu0 %v135
    %340 = vmatprep.subr.mxu0 0.0
    %341 = vmatpush1.msra.mxu0 %v136
    %342 = vmatprep.subr.mxu0 0.0
    %343 = vmatpush1.msra.mxu0 %v137
    %344 = vmatprep.subr.mxu0 0.0
    %345 = vmatpush1.msra.mxu0 %v138
    %346 = vmatprep.subr.mxu0 0.0
    %347 = vmatpush1.msra.mxu0 %v139
    %348 = vmatprep.subr.mxu0 0.0
    %349 = vmatpush1.msra.mxu0 %v140
    %350 = vmatprep.subr.mxu0 0.0
    %351 = vmatpush1.msra.mxu0 %v141
    %352 = vmatprep.subr.mxu0 0.0
    %353 = vmatpush1.msra.mxu0 %v142
    %354 = vmatprep.subr.mxu0 0.0
    %355 = vmatpush1.msra.mxu0 %v143
    %356 = vmatprep.subr.mxu0 0.0
    %357 = vmatpush1.msra.mxu0 %v144
    %358 = vmatprep.subr.mxu0 0.0
    %359 = vmatpush1.msra.mxu0 %v145
    %360 = vmatprep.subr.mxu0 0.0
    %361 = vmatpush1.msra.mxu0 %v146
    %362 = vmatprep.mubr.f32.mxu0 %v44
    %363 = vmatmul.mubr.f32.gmra.mrb[0].mxu0 %v43
    %v364 = vpop.f32.mrb[0].mxu0
    %v365 = vadd.f32 %v290, %v364
    %v366 = vpop.f32.mrb[0].mxu0
    %367 = vmatprep.mubr.f32.mxu0 %v50
    %368 = vmatmul.mubr.f32.gmra.mrb[0].mxu0 %v49
    %v369 = vpop.f32.mrb[0].mxu0
    %v370 = vadd.f32 %v295, %v369
    %v371 = vpop.f32.mrb[0].mxu0
    %372 = vdwg.mxu0
    %v373 = vmax.f32 %v365, 0.0
    %v374 = vmax.f32 %v370, 0.0
    %v375 = vand.u32 2147483647, %v365
    %v376 = vand.u32 2147483647, %v370
    %v377 = vsub.f32 0.0, %v375
    %v378 = vsub.f32 0.0, %v376
    %v379 = vmul.f32 %v377, 1.442695
    %v380 = vpow.pop %v379
    %v381 = vmul.f32 %v378, 1.442695
    %v382 = vpow.pop %v381
    %v383 = vadd.f32 %v380, 1.0
    %v384 = vlog2.pop %v383
    %v385 = vmul.f32 %v384, 0.6931472
    %v386 = vmul.f32 -0.5, %v380
    %v387 = vadd.f32 %v386, 1.0
    %v388 = vmul.f32 %v387, %v380
    %v389 = vand.u32 2147483647, %v380
    %vm390 = vcmp.lt.f32.partialorder %v389, 0.0004427343
    %v391 = vsel %vm390, %v388, %v385
    %v392 = vadd.f32 %v382, 1.0
    %v393 = vlog2.pop %v392
    %v394 = vmul.f32 %v393, 0.6931472
    %v395 = vmul.f32 -0.5, %v382
    %v396 = vadd.f32 %v395, 1.0
    %v397 = vmul.f32 %v396, %v382
    %v398 = vand.u32 2147483647, %v382
    %vm399 = vcmp.lt.f32.partialorder %v398, 0.0004427343
    %v400 = vsel %vm399, %v397, %v394
    %v401 = vadd.f32 %v373, %v391
    %v402 = vadd.f32 %v374, %v400
    %403 = vxpose.xlu0.b32.start [1/16] %v401, 128
    %404 = vxpose.xlu0.b32.cont [2/16] %v402, 128
    %405 = vxpose.xlu0.b32.cont [3/16] 0.0, 128
    %406 = vxpose.xlu0.b32.cont [4/16] 0.0, 128
    %407 = vxpose.xlu0.b32.cont [5/16] 0.0, 128
    %408 = vxpose.xlu0.b32.cont [6/16] 0.0, 128
    %409 = vxpose.xlu0.b32.cont [7/16] 0.0, 128
    %410 = vxpose.xlu0.b32.cont [8/16] 0.0, 128
    %411 = vxpose.xlu0.b32.cont [9/16] 0.0, 128
    %412 = vxpose.xlu0.b32.cont [10/16] 0.0, 128
    %413 = vxpose.xlu0.b32.cont [11/16] 0.0, 128
    %414 = vxpose.xlu0.b32.cont [12/16] 0.0, 128
    %415 = vxpose.xlu0.b32.cont [13/16] 0.0, 128
    %416 = vxpose.xlu0.b32.cont [14/16] 0.0, 128
    %417 = vxpose.xlu0.b32.cont [15/16] 0.0, 128
    %418 = vxpose.xlu0.b32.end [16/16] 0.0, 128
    %v419 = vpop.trf.xlu0
    %v420 = vpop.trf.xlu0
    %v421 = vpop.trf.xlu0
    %v422 = vpop.trf.xlu0
    %v423 = vpop.trf.xlu0
    %v424 = vpop.trf.xlu0
    %v425 = vpop.trf.xlu0
    %v426 = vpop.trf.xlu0
    %v427 = vpop.trf.xlu0
    %v428 = vpop.trf.xlu0
    %v429 = vpop.trf.xlu0
    %v430 = vpop.trf.xlu0
    %v431 = vpop.trf.xlu0
    %v432 = vpop.trf.xlu0
    %v433 = vpop.trf.xlu0
    %v434 = vpop.trf.xlu0
    %v435 = vld [vmem:[%s2] sm:$0xf]
    %v436 = vld [vmem:[%s3] sm:$0xf]
    %v437 = vld [vmem:[%s4] sm:$0x1]
    %v438 = vlog2.pop %v436
    %v439 = vmul.f32 %v438, 0.6931472
    %v440 = vlaneseq
    %v441 = vshrl.u32 %v440, 7
    %v442 = vsub.s32 0, %v441
    %v443 = vrot.slane %v419, %v442
    %v444 = vmul.f32 %v439, %v443
    %vm445 = vcmask 125952
    %v446 = vsel %vm445, %v444, -inf
    %v447 = vrot.slane %v446, 4
    %v448 = vmax.f32 %v446, %v447
    %v449 = vrot.slane %v448, 2
    %v450 = vmax.f32 %v448, %v449
    %v451 = vrot.slane %v450, 1
    %v452 = vmax.f32 %v450, %v451
    %v453 = vsub.f32 %v444, %v452
    %v454 = vmul.f32 %v453, 1.442695
    %v455 = vpow.pop %v454
    %v456 = vsel %vm445, %v455, 0.0
    %v457 = vrot.slane %v456, 4
    %v458 = vadd.f32 %v456, %v457
    %v459 = vrot.slane %v458, 2
    %v460 = vadd.f32 %v458, %v459
    %v461 = vrot.slane %v460, 1
    %v462 = vadd.f32 %v460, %v461
    %v463 = vlog2.pop %v462
    %v464 = vmul.f32 %v463, 0.6931472
    %v465 = vmul.f32 %v455, %v453
    %v466 = vsel %vm445, %v465, 0.0
    %v467 = vrot.slane %v466, 4
    %v468 = vadd.f32 %v466, %v467
    %v469 = vrot.slane %v468, 2
    %v470 = vadd.f32 %v468, %v469
    %v471 = vrot.slane %v470, 1
    %v472 = vadd.f32 %v470, %v471
    %v473 = vrcp.pop %v462
    %v474 = vmul.f32 %v472, %v473
    %v475 = vsub.f32 %v464, %v474
    %v476 = vadd.f32 %v435, %v444
    %v477 = vsel %vm445, %v476, -inf
    %v478 = vrot.slane %v477, 4
    %v479 = vmax.f32 %v477, %v478
    %v480 = vrot.slane %v479, 2
    %v481 = vmax.f32 %v479, %v480
    %v482 = vrot.slane %v481, 1
    %v483 = vmax.f32 %v481, %v482
    %v484 = vsub.f32 %v476, %v483
    %v485 = vmul.f32 %v484, 1.442695
    %v486 = vpow.pop %v485
    %v487 = vsel %vm445, %v486, 0.0
    %v488 = vrot.slane %v487, 4
    %v489 = vadd.f32 %v487, %v488
    %v490 = vrot.slane %v489, 2
    %v491 = vadd.f32 %v489, %v490
    %v492 = vrot.slane %v491, 1
    %v493 = vadd.f32 %v491, %v492
    %v494 = vlog2.pop %v493
    %v495 = vmul.f32 %v494, 0.6931472
    %v496 = vadd.f32 %v483, %v495
    %v497 = vlaneseq
    %v498 = vshrl.u32 %v497, 7
    %v499 = vlaneseq
    %v500 = vshrl.u32 %v499, 7
    %v501 = vsub.s32 0, %v500
    %v502 = vrot.slane %v437, %v501
    %vm503 = vcmp.eq.s32.totalorder %v498, %v502
    %v504 = vsel %vm503, %v476, 0.0
    %v505 = vsel %vm445, %v504, 0.0
    %v506 = vrot.slane %v505, 4
    %v507 = vadd.f32 %v505, %v506
    %v508 = vrot.slane %v507, 2
    %v509 = vadd.f32 %v507, %v508
    %v510 = vrot.slane %v509, 1
    %v511 = vadd.f32 %v509, %v510
    %v512 = vsub.f32 %v496, %v511
    %s513 = smul.u32 0, 16
    %v514 = vlaneseq
    %v515 = vand.u32 %v514, 127
    %v516 = vstv %s513
    %v517 = vadd.s32 %v516, %v515
    %vm518 = vcmp.lt.s32.totalorder %v517, 16
    %v519 = vstv %s38
    %v520 = vmul.f32 %v519, %v475
    %v521 = vadd.f32 %v512, %v520
    %v522 = vsel %vm518, %v521, 0.0
    %vm523 = vcmask 130048
    %v524 = vsel %vm523, %v522, 0.0
    %525 = vadd.xlane.f32.xlu0 %v524
    %v526 = vpop.xlane.xlu0 %525
    %vm527 = vcmask 0
    %528 = vst.msk [vmem:[#allocation5] sm:$0x1] %vm527, %v526
    // Predicated region
    $region30: #{tpu_custom_call.1} parent=1 // pred_check
      _
    $region31: #{tpu_custom_call.1} parent=1 // pred_check_branch
      %530 = sbr.rel (0) target = $region33
    $region32: #{tpu_custom_call.1} parent=1 // pred_region
      %s532 = ssub.s32 16, 16
      %533 = vsyncadd [#allocation3], %s532
      %s535 = sshll.u32 [#allocation5], 4
      %s536 = int_to_ptr.vmem [resolvable:$true] %s535
      %538 = dma.vmem_to_hbm [thread:$0]  %s536, 16, %s6, [#allocation3]
    $region33: #{tpu_custom_call.1} parent=1 // pred_fallthru
      _
    // Predicated region
    $region34: #{tpu_custom_call.1} parent=1 // pred_check
      _
    $region35: #{tpu_custom_call.1} parent=1 // pred_check_branch
      %540 = sbr.rel (0) target = $region37
    $region36: #{tpu_custom_call.1} parent=1 // pred_region
      %541 = dma.done [#allocation3], 16
    $region37: #{tpu_custom_call.1} parent=1 // pred_fallthru
      _
    %542 = vsyncpa [#allocation3], 1
    %543 = vsyncpa [#allocation4], 1

</llo_original>
